<compile_context>
chip_gen: v7x
topology: tpu7x:2x2x1
jax: 0.10.0
libtpu: 0.0.40
codegen_flags: <defaults>
</compile_context>

<pallas_src>
import functools
import math

import jax
import jax.numpy as jnp
from jax.experimental import pallas as pl
from jax.experimental.pallas import tpu as pltpu


def llama3_scaled_inv_freq(dim, base=500000.0, factor=8.0, low_freq_factor=1.0,
                           high_freq_factor=4.0,
                           original_max_position_embeddings=8192):
    """fp32 inv_freq with Llama3 rope scaling (one-time buffer init)."""
    exponent = jnp.arange(0, dim, 2, dtype=jnp.float32) / dim
    inv_freq = 1.0 / (base ** exponent)
    old_context_len = original_max_position_embeddings
    low_freq_wavelen = old_context_len / low_freq_factor
    high_freq_wavelen = old_context_len / high_freq_factor
    wavelen = 2.0 * math.pi / inv_freq
    smooth = (old_context_len / wavelen - low_freq_factor) / (
        high_freq_factor - low_freq_factor)
    smoothed = (1.0 - smooth) * inv_freq / factor + smooth * inv_freq
    new_freq = jnp.where(
        wavelen < high_freq_wavelen, inv_freq,
        jnp.where(wavelen > low_freq_wavelen, inv_freq / factor, smoothed))
    return new_freq.astype(jnp.float32)


def _rope_kernel(pos_ref, invf_ref, cos_ref, sin_ref, *, rep, dim, dedup):
    # pos_ref: (tile_rows, rep) int32; invf_ref: (1, half) if dedup else (1, rep*dim)
    pos = pos_ref[...].astype(jnp.float32)   # exact for positions < 2^24
    invf = invf_ref[...]                      # f32
    if dedup:
        # rep == 1, half = dim // 2 >= 128: evaluate cos/sin on half the lanes
        # and duplicate into both output halves (emb = concat([freqs, freqs])).
        freqs = pos * invf                             # (R, half)
        c = jnp.cos(freqs)
        s = jnp.sin(freqs)
        cos_ref[...] = jnp.concatenate([c, c], axis=-1).astype(cos_ref.dtype)
        sin_ref[...] = jnp.concatenate([s, s], axis=-1).astype(sin_ref.dtype)
    else:
        # Lane-dense folded path (rep consecutive positions per 128-lane row);
        # rep == 1 reduces to the plain full-dim path.
        cs, ss = [], []
        for j in range(rep):
            freqs = pos[:, j:j + 1] * invf[:, j * dim:(j + 1) * dim]  # (R, dim)
            cs.append(jnp.cos(freqs))
            ss.append(jnp.sin(freqs))
        c = cs[0] if rep == 1 else jnp.concatenate(cs, axis=-1)
        s = ss[0] if rep == 1 else jnp.concatenate(ss, axis=-1)
        cos_ref[...] = c.astype(cos_ref.dtype)
        sin_ref[...] = s.astype(sin_ref.dtype)


def _round_up(n, m):
    return ((n + m - 1) // m) * m


def llama3_rotary_embedding(position_ids, inv_freq, *, out_dtype,
                            max_tile_rows=8192,
                            target_block_bytes=4 * 1024 * 1024):
    """Returns (cos, sin), each (batch, seq, 2*len(inv_freq)) in out_dtype."""
    B, S = position_ids.shape
    half = inv_freq.shape[0]
    dim = 2 * half
    N = B * S
    out_itemsize = jnp.dtype(out_dtype).itemsize

    # Lane-dense folding for dim < 128: pack `rep` consecutive positions into a
    # single 128-lane output row so stores are unmasked full-width.
    rep = 1
    if dim < 128 and 128 % dim == 0 and N % (128 // dim) == 0:
        rep = 128 // dim
    width = rep * dim
    rows = N // rep

    # Half-dim dedup only pays off when half itself spans >= 1 full vreg lane
    # extent (dim >= 256); below that the EUP work per vreg is unchanged.
    dedup = (rep == 1) and (half >= 128)

    if dedup:
        invf_row = inv_freq.reshape(1, half).astype(jnp.float32)
    else:
        invf_row = jnp.tile(jnp.concatenate([inv_freq, inv_freq]), rep)
        invf_row = invf_row.reshape(1, width).astype(jnp.float32)

    # Positions stay int32 (no wrapper-side f32 copy); kernel casts.
    pos2d = position_ids.reshape(rows, rep).astype(jnp.int32)

    # Row tile: big blocks (multi-MiB per output per grid step) rounded to the
    # output dtype's sublane packing (8 for f32, 16 for bf16, 32 for int8).
    packing = max(8, 32 // out_itemsize)
    row_bytes = width * out_itemsize
    tr = max(packing, target_block_bytes // row_bytes)
    tr = min(tr, max_tile_rows)
    tr = _round_up(tr, packing)
    if tr >= rows:
        tr = _round_up(rows, packing)
    else:
        # Megacore shaping: prefer an even number of grid steps (v7x: 2 TCs),
        # letting any ragged tail be one core's last step.
        steps = pl.cdiv(rows, tr)
        if steps > 1 and steps % 2 == 1:
            tr = _round_up(pl.cdiv(rows, steps + 1), packing)
    grid = (pl.cdiv(rows, tr),)

    kernel = functools.partial(_rope_kernel, rep=rep, dim=dim, dedup=dedup)
    invf_width = invf_row.shape[1]

    cost = pl.CostEstimate(
        flops=N * dim,
        transcendentals=2 * N * dim,
        bytes_accessed=2 * N * dim * out_itemsize + N * 4 + half * 4,
    )

    cos2d, sin2d = pl.pallas_call(
        kernel,
        out_shape=(
            jax.ShapeDtypeStruct((rows, width), out_dtype),
            jax.ShapeDtypeStruct((rows, width), out_dtype),
        ),
        grid_spec=pltpu.PrefetchScalarGridSpec(
            num_scalar_prefetch=0,
            grid=grid,
            in_specs=[
                pl.BlockSpec((tr, rep), lambda i: (i, 0)),           # positions
                pl.BlockSpec((1, invf_width), lambda i: (0, 0)),     # inv_freq row
            ],
            out_specs=[
                pl.BlockSpec((tr, width), lambda i: (i, 0)),         # cos
                pl.BlockSpec((tr, width), lambda i: (i, 0)),         # sin
            ],
        ),
        compiler_params=pltpu.CompilerParams(
            dimension_semantics=("parallel",),
            vmem_limit_bytes=48 * 1024 * 1024,
        ),
        cost_estimate=cost,
    )(pos2d, invf_row)

    return cos2d.reshape(B, S, dim), sin2d.reshape(B, S, dim)


def llama3_rotary_embedding_ref(position_ids, inv_freq, out_dtype):
    """Pure-JAX reference matching the PyTorch forward semantics."""
    pos = position_ids.astype(jnp.float32)                   # (B, S)
    freqs = pos[:, :, None] * inv_freq[None, None, :]        # (B, S, dim//2)
    emb = jnp.concatenate([freqs, freqs], axis=-1)           # (B, S, dim)
    return jnp.cos(emb).astype(out_dtype), jnp.sin(emb).astype(out_dtype)


if __name__ == "__main__":
    key = jax.random.PRNGKey(0)
    batch, seq = 2, 8

    # Exercise all three kernel paths at small shapes:
    #   dim=64  f32  -> lane-dense folded path (rep=2, full 128-lane stores)
    #   dim=128 bf16 -> standard Llama3 head_dim, bf16 outputs
    #   dim=256 f32  -> half-dim dedup path (half >= 128 lanes)
    configs = (
        (64, jnp.float32, 1e-4),
        (128, jnp.bfloat16, 2e-2),
        (256, jnp.float32, 1e-4),
    )
    for dim, x_dtype, tol in configs:
        inv_freq = llama3_scaled_inv_freq(
            dim, base=500000.0, factor=8.0, low_freq_factor=1.0,
            high_freq_factor=4.0, original_max_position_embeddings=8192)

        key, sub = jax.random.split(key)
        position_ids = jax.random.randint(sub, (batch, seq), 0, 128,
                                          dtype=jnp.int32)

        cos, sin = llama3_rotary_embedding(position_ids, inv_freq,
                                           out_dtype=x_dtype)
        cos, sin = jax.block_until_ready((cos, sin))

        cos_ref, sin_ref = llama3_rotary_embedding_ref(position_ids, inv_freq,
                                                       x_dtype)
        assert cos.shape == (batch, seq, dim) and sin.shape == (batch, seq, dim)
        assert cos.dtype == x_dtype and sin.dtype == x_dtype
        assert jnp.allclose(cos.astype(jnp.float32),
                            cos_ref.astype(jnp.float32), atol=tol, rtol=tol)
        assert jnp.allclose(sin.astype(jnp.float32),
                            sin_ref.astype(jnp.float32), atol=tol, rtol=tol)

    print("KERNEL_OK")
</pallas_src>

<mosaic_0001>
module attributes {stable_mosaic.version = 11 : i64} {
  func.func @_rope_kernel(%arg0: i32, %arg1: memref<8x2xi32, #tpu.memory_space<vmem>>, %arg2: memref<1x128xf32, #tpu.memory_space<vmem>>, %arg3: memref<8x128xf32, #tpu.memory_space<vmem>>, %arg4: memref<8x128xf32, #tpu.memory_space<vmem>>) attributes {dimension_semantics = [#tpu.dimension_semantics<parallel>], iteration_bounds = array<i64: 1>, scalar_prefetch = 0 : i64, scratch_operands = 0 : i64, tpu.core_type = #tpu.core_type<tc>, window_params = [{transform_indices = @transform_0, window_bounds = array<i64: 8, 2>}, {pipeline_mode = #tpu.pipeline_mode<synchronous>, transform_indices = @transform_1, window_bounds = array<i64: 1, 128>}, {transform_indices = @transform_2, window_bounds = array<i64: 8, 128>}, {transform_indices = @transform_3, window_bounds = array<i64: 8, 128>}]} {
    %c0 = arith.constant 0 : index
    %c0_0 = arith.constant 0 : index
    %0 = vector.load %arg1[%c0, %c0_0] : memref<8x2xi32, #tpu.memory_space<vmem>>, vector<8x2xi32>
    %1 = arith.sitofp %0 : vector<8x2xi32> to vector<8x2xf32>
    %c0_1 = arith.constant 0 : index
    %c0_2 = arith.constant 0 : index
    %2 = vector.load %arg2[%c0_1, %c0_2] : memref<1x128xf32, #tpu.memory_space<vmem>>, vector<1x128xf32>
    %3 = vector.extract_strided_slice %1 {offsets = [0, 0], sizes = [8, 1], strides = [1, 1]} : vector<8x2xf32> to vector<8x1xf32>
    %4 = vector.extract_strided_slice %2 {offsets = [0, 0], sizes = [1, 64], strides = [1, 1]} : vector<1x128xf32> to vector<1x64xf32>
    %5 = vector.broadcast %3 : vector<8x1xf32> to vector<8x64xf32>
    %6 = vector.broadcast %4 : vector<1x64xf32> to vector<8x64xf32>
    %7 = arith.mulf %5, %6 : vector<8x64xf32>
    %8 = math.cos %7 : vector<8x64xf32>
    %9 = math.sin %7 : vector<8x64xf32>
    %10 = vector.extract_strided_slice %1 {offsets = [0, 1], sizes = [8, 1], strides = [1, 1]} : vector<8x2xf32> to vector<8x1xf32>
    %11 = vector.extract_strided_slice %2 {offsets = [0, 64], sizes = [1, 64], strides = [1, 1]} : vector<1x128xf32> to vector<1x64xf32>
    %12 = vector.broadcast %10 : vector<8x1xf32> to vector<8x64xf32>
    %13 = vector.broadcast %11 : vector<1x64xf32> to vector<8x64xf32>
    %14 = arith.mulf %12, %13 : vector<8x64xf32>
    %15 = math.cos %14 : vector<8x64xf32>
    %16 = math.sin %14 : vector<8x64xf32>
    %17 = tpu.concatenate %8, %15 in 1 : vector<8x64xf32>, vector<8x64xf32> -> vector<8x128xf32>
    %18 = tpu.concatenate %9, %16 in 1 : vector<8x64xf32>, vector<8x64xf32> -> vector<8x128xf32>
    %c0_3 = arith.constant 0 : index
    %c0_4 = arith.constant 0 : index
    %19 = vector.load %arg3[%c0_3, %c0_4] : memref<8x128xf32, #tpu.memory_space<vmem>>, vector<8x128xf32>
    tpu.vector_store %arg3[%c0_3, %c0_4], %17 {strides = array<i32>} : memref<8x128xf32, #tpu.memory_space<vmem>>, vector<8x128xf32>,
    %c0_5 = arith.constant 0 : index
    %c0_6 = arith.constant 0 : index
    %20 = vector.load %arg4[%c0_5, %c0_6] : memref<8x128xf32, #tpu.memory_space<vmem>>, vector<8x128xf32>
    tpu.vector_store %arg4[%c0_5, %c0_6], %18 {strides = array<i32>} : memref<8x128xf32, #tpu.memory_space<vmem>>, vector<8x128xf32>,
    return
  }
  func.func @transform_0(%arg0: i32) -> (i32, i32) {
    %c0_i32 = arith.constant 0 : i32
    %c0_i32_0 = arith.constant 0 : i32
    return %arg0, %c0_i32 : i32, i32
  }
  func.func @transform_1(%arg0: i32) -> (i32, i32) {
    %c0_i32 = arith.constant 0 : i32
    %c0_i32_0 = arith.constant 0 : i32
    %c0_i32_1 = arith.constant 0 : i32
    return %c0_i32, %c0_i32_0 : i32, i32
  }
  func.func @transform_2(%arg0: i32) -> (i32, i32) {
    %c0_i32 = arith.constant 0 : i32
    %c0_i32_0 = arith.constant 0 : i32
    return %arg0, %c0_i32 : i32, i32
  }
  func.func @transform_3(%arg0: i32) -> (i32, i32) {
    %c0_i32 = arith.constant 0 : i32
    %c0_i32_0 = arith.constant 0 : i32
    return %arg0, %c0_i32 : i32, i32
  }
}

</mosaic_0001>

<llo_original>
// kernel: tpu_custom_call.1
$region0: #{tpu_custom_call.1}
  #allocation0 [shape = 'u32[]', space=smem, size = 0x4, offset = 0x4, fixed_abs, tag = 'smem constant byte address 0x4 - core index']
  #allocation1 [shape = 'u32[144,128]{1,0:T(1,128)}', space=vmem, size = 0x12000, scoped, tag = 'internal scratch']
  %s0 = inlined_call_operand.vmem [shape: s32[8,2], index: 0, kind: input, shape index: {}]
  %s1 = inlined_call_operand.vmem [shape: f32[1,128], index: 1, kind: input, shape index: {}]
  %s2 = inlined_call_operand.hbm [shape: f32[8,128], index: 2, kind: output, shape index: {0}]
  %s3 = inlined_call_operand.hbm [shape: f32[8,128], index: 3, kind: output, shape index: {1}]
  %4 = xla_tuple %s2, %s3
  %s5 = sld [smem:[#allocation0]]
  $region26: #{tpu_custom_call.1} parent=0
    _
  %s7 = ssub.s32 1, %s5
  %s8 = scalar_select 0, %s7, %s5
  $region1: #{tpu_custom_call.1} parent=0
    #allocation2 [shape = 'u8[4096]{0}', space=vmem, size = 0x1000, scoped, tag = 'output window, operand 0, single buffered']
    #allocation3 [shape = 's32[1]{0}', space=sflag, size = 0x4, scoped, tag = 'scoped memory for tpu_custom_call.1']
    #allocation4 [shape = 'u8[4096]{0}', space=vmem, size = 0x1000, scoped, tag = 'output window, operand 1, single buffered']
    #allocation5 [shape = 's32[1]{0}', space=sflag, size = 0x4, scoped, tag = 'scoped memory for tpu_custom_call.1']
    %9 = vsyncpa [#allocation3], 0
    %10 = vsyncpa [#allocation5], 0
    // Predicated region
    $region2: #{tpu_custom_call.1} parent=1 // pred_check
      _
    $region3: #{tpu_custom_call.1} parent=1 // pred_check_branch
      %12 = sbr.rel (0) target = $region5
    $region4: #{tpu_custom_call.1} parent=1 // pred_region
      _
    $region5: #{tpu_custom_call.1} parent=1 // pred_fallthru
      _
    // Predicated region
    $region6: #{tpu_custom_call.1} parent=1 // pred_check
      _
    $region7: #{tpu_custom_call.1} parent=1 // pred_check_branch
      %14 = sbr.rel (0) target = $region9
    $region8: #{tpu_custom_call.1} parent=1 // pred_region
      _
    $region9: #{tpu_custom_call.1} parent=1 // pred_fallthru
      _
    %v15 = vld [vmem:[%s0] sm:$0xff]
    %v16 = vcvt.s32.f32 %v15
    %v17 = vld [vmem:[%s1] sm:$0x1]
    %19 = vset.pattern.permute.xlu0 0
    %20 = vperm.xlu0 %19, %v16
    %v21 = vpop.permute.xlu0 %20
    %v24 = vlaneseq
    %v25 = vshrl.u32 %v24, 7
    %v26 = vsub.s32 0, %v25
    %v27 = vrot.slane %v17, %v26
    %v29 = vmul.f32 %v21, %v27
    %v30 = vand.u32 2147483647, %v29
    %vm31 = vcmp.le.f32.partialorder %v30, 0.7853982
    %vm32 = vcmp.lt.s32.totalorder %v29, 0
    %v33 = vand.u32 %v29, 2139095040
    %v34 = vshrl.u32 %v33, 23
    %v35 = vsub.s32 %v34, 127
    %v36 = vand.u32 2147483647, %v29
    %v37 = vand.u32 %v36, 8388607
    %v38 = vor.u32 %v37, 8388608
    %v39 = vsub.s32 0, %v38
    %v40 = vadd.s32 %v35, 1
    %vm41 = vcmp.gt.s32.totalorder %v40, 0
    %v42 = vsel %vm41, %v40, 0
    %v43 = vshrl.u32 %v42, 5
    %v44 = vand.u32 %v42, 31
    %v45 = vsub.s32 32, %v44
    %v46 = vshrl.u32 683565275, %v45
    %v47 = vshll.u32 683565275, %v44
    %v48 = vshrl.u32 2475754826, %v45
    %v49 = vor.u32 %v47, %v48
    %v50 = vshll.u32 2475754826, %v44
    %v51 = vshrl.u32 2131351028, %v45
    %v52 = vor.u32 %v50, %v51
    %v53 = vshll.u32 2131351028, %v44
    %v54 = vshrl.u32 2102212464, %v45
    %v55 = vor.u32 %v53, %v54
    %v56 = vshll.u32 2102212464, %v44
    %v57 = vshrl.u32 920167782, %v45
    %v58 = vor.u32 %v56, %v57
    %v59 = vshll.u32 920167782, %v44
    %v60 = vshrl.u32 1326507024, %v45
    %v61 = vor.u32 %v59, %v60
    %vm62 = vcmp.lt.s32.totalorder %v43, 1
    %vm63 = vcmp.lt.s32.totalorder %v43, 2
    %vm64 = vcmp.lt.s32.totalorder %v43, 3
    %vm65 = vcmp.lt.s32.totalorder %v43, 4
    %v66 = vsel %vm62, %v46, %v49
    %v67 = vsel %vm65, %v55, 2102212464
    %v68 = vsel %vm64, %v52, %v67
    %v69 = vsel %vm63, %v66, %v68
    %v70 = vsel %vm62, %v49, %v52
    %v71 = vsel %vm65, %v58, 920167782
    %v72 = vsel %vm64, %v55, %v71
    %v73 = vsel %vm63, %v70, %v72
    %v74 = vsel %vm62, %v52, %v55
    %v75 = vsel %vm65, %v61, 1326507024
    %v76 = vsel %vm64, %v58, %v75
    %v77 = vsel %vm63, %v74, %v76
    %v78 = vshll.u32 %v38, 8
    %v79 = vmul.u32.u64.compose %v78, %v77
    %v80 = vextract.low.u32 %v79
    %v81 = vextract.high.u32 %v79
    %v82 = vmul.u32.u64.compose %v78, %v73
    %v83 = vextract.low.u32 %v82
    %v84 = vextract.high.u32 %v82
    %v85 = vmul.u32 %v78, %v69
    %v86 = vadd.s32 %v81, %v83
    %vm87 = vc.u32 %v81, %v83
    %v88 = vadd.s32 %v84, 1
    %v89 = vsel %vm87, %v88, %v84
    %v90 = vadd.s32 %v85, %v89
    %v91 = vadd.s32 %v90, 536870912
    %v92 = vshrl.u32 %v91, 30
    %v93 = vshll.u32 %v92, 30
    %v94 = vsub.s32 %v90, %v93
    %vm95 = vcmp.lt.s32.totalorder %v94, 0
    %v96 = vsub.s32 0, %v94
    %v97 = vsel %vm95, %v96, %v94
    %v98 = vclz %v97
    %v99 = vsub.s32 %v98, 2
    %vm100 = vcmp.gt.s32.totalorder 0, %v99
    %v101 = vsel %vm100, 0, %v99
    %v102 = vsub.s32 32, %v101
    %v103 = vshll.u32 %v94, %v101
    %v104 = vshrl.u32 %v86, %v102
    %v105 = vor.u32 %v103, %v104
    %v106 = vsub.s32 4294967266, %v101
    %v107 = vadd.s32 %v106, 127
    %v108 = vshll.u32 %v107, 23
    %v109 = vor.u32 4788187, %v108
    %v110 = vand.u32 2147483647, %v109
    %v112 = vcvt.s32.f32 %v105
    %v113 = vmul.f32 %v112, %v110
    %v114 = vxor.u32 %v113, 2147483648
    %v115 = vsel %vm32, %v114, %v113
    %v116 = vsub.s32 4, %v92
    %v117 = vsel %vm32, %v116, %v92
    %v118 = vsel %vm31, %v29, %v115
    %v119 = vsel %vm31, 0, %v117
    %v120 = vcosq.f32.pop %v118
    %v121 = vsinq.f32.pop %v118
    %vm122 = vweird.f32 %v29
    %v123 = vand.u32 %v119, 3
    %vm124 = vcmp.lt.s32.totalorder %v123, 2
    %vm125 = vcmp.eq.s32.totalorder %v123, 0
    %v126 = vxor.u32 %v121, 2147483648
    %v127 = vsel %vm125, %v120, %v126
    %vm128 = vcmp.eq.s32.totalorder %v123, 2
    %v129 = vxor.u32 %v120, 2147483648
    %v130 = vsel %vm128, %v129, %v121
    %v131 = vsel %vm124, %v127, %v130
    %v132 = vsel %vm122, nan, %v131
    %v133 = vand.u32 2147483647, %v29
    %vm134 = vcmp.le.f32.partialorder %v133, 0.7853982
    %vm135 = vcmp.lt.s32.totalorder %v29, 0
    %v136 = vand.u32 %v29, 2139095040
    %v137 = vshrl.u32 %v136, 23
    %v138 = vsub.s32 %v137, 127
    %v139 = vand.u32 2147483647, %v29
    %v140 = vand.u32 %v139, 8388607
    %v141 = vor.u32 %v140, 8388608
    %v142 = vsub.s32 0, %v141
    %v143 = vadd.s32 %v138, 1
    %vm144 = vcmp.gt.s32.totalorder %v143, 0
    %v145 = vsel %vm144, %v143, 0
    %v146 = vshrl.u32 %v145, 5
    %v147 = vand.u32 %v145, 31
    %v148 = vsub.s32 32, %v147
    %v149 = vshrl.u32 683565275, %v148
    %v150 = vshll.u32 683565275, %v147
    %v151 = vshrl.u32 2475754826, %v148
    %v152 = vor.u32 %v150, %v151
    %v153 = vshll.u32 2475754826, %v147
    %v154 = vshrl.u32 2131351028, %v148
    %v155 = vor.u32 %v153, %v154
    %v156 = vshll.u32 2131351028, %v147
    %v157 = vshrl.u32 2102212464, %v148
    %v158 = vor.u32 %v156, %v157
    %v159 = vshll.u32 2102212464, %v147
    %v160 = vshrl.u32 920167782, %v148
    %v161 = vor.u32 %v159, %v160
    %v162 = vshll.u32 920167782, %v147
    %v163 = vshrl.u32 1326507024, %v148
    %v164 = vor.u32 %v162, %v163
    %vm165 = vcmp.lt.s32.totalorder %v146, 1
    %vm166 = vcmp.lt.s32.totalorder %v146, 2
    %vm167 = vcmp.lt.s32.totalorder %v146, 3
    %vm168 = vcmp.lt.s32.totalorder %v146, 4
    %v169 = vsel %vm165, %v149, %v152
    %v170 = vsel %vm168, %v158, 2102212464
    %v171 = vsel %vm167, %v155, %v170
    %v172 = vsel %vm166, %v169, %v171
    %v173 = vsel %vm165, %v152, %v155
    %v174 = vsel %vm168, %v161, 920167782
    %v175 = vsel %vm167, %v158, %v174
    %v176 = vsel %vm166, %v173, %v175
    %v177 = vsel %vm165, %v155, %v158
    %v178 = vsel %vm168, %v164, 1326507024
    %v179 = vsel %vm167, %v161, %v178
    %v180 = vsel %vm166, %v177, %v179
    %v181 = vshll.u32 %v141, 8
    %v182 = vmul.u32.u64.compose %v181, %v180
    %v183 = vextract.low.u32 %v182
    %v184 = vextract.high.u32 %v182
    %v185 = vmul.u32.u64.compose %v181, %v176
    %v186 = vextract.low.u32 %v185
    %v187 = vextract.high.u32 %v185
    %v188 = vmul.u32 %v181, %v172
    %v189 = vadd.s32 %v184, %v186
    %vm190 = vc.u32 %v184, %v186
    %v191 = vadd.s32 %v187, 1
    %v192 = vsel %vm190, %v191, %v187
    %v193 = vadd.s32 %v188, %v192
    %v194 = vadd.s32 %v193, 536870912
    %v195 = vshrl.u32 %v194, 30
    %v196 = vshll.u32 %v195, 30
    %v197 = vsub.s32 %v193, %v196
    %vm198 = vcmp.lt.s32.totalorder %v197, 0
    %v199 = vsub.s32 0, %v197
    %v200 = vsel %vm198, %v199, %v197
    %v201 = vclz %v200
    %v202 = vsub.s32 %v201, 2
    %vm203 = vcmp.gt.s32.totalorder 0, %v202
    %v204 = vsel %vm203, 0, %v202
    %v205 = vsub.s32 32, %v204
    %v206 = vshll.u32 %v197, %v204
    %v207 = vshrl.u32 %v189, %v205
    %v208 = vor.u32 %v206, %v207
    %v209 = vsub.s32 4294967266, %v204
    %v210 = vadd.s32 %v209, 127
    %v211 = vshll.u32 %v210, 23
    %v212 = vor.u32 4788187, %v211
    %v213 = vand.u32 2147483647, %v212
    %v215 = vcvt.s32.f32 %v208
    %v216 = vmul.f32 %v215, %v213
    %v217 = vxor.u32 %v216, 2147483648
    %v218 = vsel %vm135, %v217, %v216
    %v219 = vsub.s32 4, %v195
    %v220 = vsel %vm135, %v219, %v195
    %v221 = vsel %vm134, %v29, %v218
    %v222 = vsel %vm134, 0, %v220
    %v223 = vcosq.f32.pop %v221
    %v224 = vsinq.f32.pop %v221
    %vm225 = vweird.f32 %v29
    %v226 = vadd.s32 %v222, 3
    %v227 = vand.u32 %v226, 3
    %vm228 = vcmp.lt.s32.totalorder %v227, 2
    %vm229 = vcmp.eq.s32.totalorder %v227, 0
    %v230 = vxor.u32 %v224, 2147483648
    %v231 = vsel %vm229, %v223, %v230
    %vm232 = vcmp.eq.s32.totalorder %v227, 2
    %v233 = vxor.u32 %v223, 2147483648
    %v234 = vsel %vm232, %v233, %v224
    %v235 = vsel %vm228, %v231, %v234
    %v236 = vsel %vm225, nan, %v235
    %237 = vset.pattern.permute.xlu0 1
    %238 = vperm.xlu0 %237, %v16
    %v239 = vpop.permute.xlu0 %238
    %v241 = vmul.f32 %v239, %v27
    %v242 = vand.u32 2147483647, %v241
    %vm243 = vcmp.le.f32.partialorder %v242, 0.7853982
    %vm244 = vcmp.lt.s32.totalorder %v241, 0
    %v245 = vand.u32 %v241, 2139095040
    %v246 = vshrl.u32 %v245, 23
    %v247 = vsub.s32 %v246, 127
    %v248 = vand.u32 2147483647, %v241
    %v249 = vand.u32 %v248, 8388607
    %v250 = vor.u32 %v249, 8388608
    %v251 = vsub.s32 0, %v250
    %v252 = vadd.s32 %v247, 1
    %vm253 = vcmp.gt.s32.totalorder %v252, 0
    %v254 = vsel %vm253, %v252, 0
    %v255 = vshrl.u32 %v254, 5
    %v256 = vand.u32 %v254, 31
    %v257 = vsub.s32 32, %v256
    %v258 = vshrl.u32 683565275, %v257
    %v259 = vshll.u32 683565275, %v256
    %v260 = vshrl.u32 2475754826, %v257
    %v261 = vor.u32 %v259, %v260
    %v262 = vshll.u32 2475754826, %v256
    %v263 = vshrl.u32 2131351028, %v257
    %v264 = vor.u32 %v262, %v263
    %v265 = vshll.u32 2131351028, %v256
    %v266 = vshrl.u32 2102212464, %v257
    %v267 = vor.u32 %v265, %v266
    %v268 = vshll.u32 2102212464, %v256
    %v269 = vshrl.u32 920167782, %v257
    %v270 = vor.u32 %v268, %v269
    %v271 = vshll.u32 920167782, %v256
    %v272 = vshrl.u32 1326507024, %v257
    %v273 = vor.u32 %v271, %v272
    %vm274 = vcmp.lt.s32.totalorder %v255, 1
    %vm275 = vcmp.lt.s32.totalorder %v255, 2
    %vm276 = vcmp.lt.s32.totalorder %v255, 3
    %vm277 = vcmp.lt.s32.totalorder %v255, 4
    %v278 = vsel %vm274, %v258, %v261
    %v279 = vsel %vm277, %v267, 2102212464
    %v280 = vsel %vm276, %v264, %v279
    %v281 = vsel %vm275, %v278, %v280
    %v282 = vsel %vm274, %v261, %v264
    %v283 = vsel %vm277, %v270, 920167782
    %v284 = vsel %vm276, %v267, %v283
    %v285 = vsel %vm275, %v282, %v284
    %v286 = vsel %vm274, %v264, %v267
    %v287 = vsel %vm277, %v273, 1326507024
    %v288 = vsel %vm276, %v270, %v287
    %v289 = vsel %vm275, %v286, %v288
    %v290 = vshll.u32 %v250, 8
    %v291 = vmul.u32.u64.compose %v290, %v289
    %v292 = vextract.low.u32 %v291
    %v293 = vextract.high.u32 %v291
    %v294 = vmul.u32.u64.compose %v290, %v285
    %v295 = vextract.low.u32 %v294
    %v296 = vextract.high.u32 %v294
    %v297 = vmul.u32 %v290, %v281
    %v298 = vadd.s32 %v293, %v295
    %vm299 = vc.u32 %v293, %v295
    %v300 = vadd.s32 %v296, 1
    %v301 = vsel %vm299, %v300, %v296
    %v302 = vadd.s32 %v297, %v301
    %v303 = vadd.s32 %v302, 536870912
    %v304 = vshrl.u32 %v303, 30
    %v305 = vshll.u32 %v304, 30
    %v306 = vsub.s32 %v302, %v305
    %vm307 = vcmp.lt.s32.totalorder %v306, 0
    %v308 = vsub.s32 0, %v306
    %v309 = vsel %vm307, %v308, %v306
    %v310 = vclz %v309
    %v311 = vsub.s32 %v310, 2
    %vm312 = vcmp.gt.s32.totalorder 0, %v311
    %v313 = vsel %vm312, 0, %v311
    %v314 = vsub.s32 32, %v313
    %v315 = vshll.u32 %v306, %v313
    %v316 = vshrl.u32 %v298, %v314
    %v317 = vor.u32 %v315, %v316
    %v318 = vsub.s32 4294967266, %v313
    %v319 = vadd.s32 %v318, 127
    %v320 = vshll.u32 %v319, 23
    %v321 = vor.u32 4788187, %v320
    %v322 = vand.u32 2147483647, %v321
    %v324 = vcvt.s32.f32 %v317
    %v325 = vmul.f32 %v324, %v322
    %v326 = vxor.u32 %v325, 2147483648
    %v327 = vsel %vm244, %v326, %v325
    %v328 = vsub.s32 4, %v304
    %v329 = vsel %vm244, %v328, %v304
    %v330 = vsel %vm243, %v241, %v327
    %v331 = vsel %vm243, 0, %v329
    %v332 = vcosq.f32.pop %v330
    %v333 = vsinq.f32.pop %v330
    %vm334 = vweird.f32 %v241
    %v335 = vand.u32 %v331, 3
    %vm336 = vcmp.lt.s32.totalorder %v335, 2
    %vm337 = vcmp.eq.s32.totalorder %v335, 0
    %v338 = vxor.u32 %v333, 2147483648
    %v339 = vsel %vm337, %v332, %v338
    %vm340 = vcmp.eq.s32.totalorder %v335, 2
    %v341 = vxor.u32 %v332, 2147483648
    %v342 = vsel %vm340, %v341, %v333
    %v343 = vsel %vm336, %v339, %v342
    %v344 = vsel %vm334, nan, %v343
    %v345 = vand.u32 2147483647, %v241
    %vm346 = vcmp.le.f32.partialorder %v345, 0.7853982
    %vm347 = vcmp.lt.s32.totalorder %v241, 0
    %v348 = vand.u32 %v241, 2139095040
    %v349 = vshrl.u32 %v348, 23
    %v350 = vsub.s32 %v349, 127
    %v351 = vand.u32 2147483647, %v241
    %v352 = vand.u32 %v351, 8388607
    %v353 = vor.u32 %v352, 8388608
    %v354 = vsub.s32 0, %v353
    %v355 = vadd.s32 %v350, 1
    %vm356 = vcmp.gt.s32.totalorder %v355, 0
    %v357 = vsel %vm356, %v355, 0
    %v358 = vshrl.u32 %v357, 5
    %v359 = vand.u32 %v357, 31
    %v360 = vsub.s32 32, %v359
    %v361 = vshrl.u32 683565275, %v360
    %v362 = vshll.u32 683565275, %v359
    %v363 = vshrl.u32 2475754826, %v360
    %v364 = vor.u32 %v362, %v363
    %v365 = vshll.u32 2475754826, %v359
    %v366 = vshrl.u32 2131351028, %v360
    %v367 = vor.u32 %v365, %v366
    %v368 = vshll.u32 2131351028, %v359
    %v369 = vshrl.u32 2102212464, %v360
    %v370 = vor.u32 %v368, %v369
    %v371 = vshll.u32 2102212464, %v359
    %v372 = vshrl.u32 920167782, %v360
    %v373 = vor.u32 %v371, %v372
    %v374 = vshll.u32 920167782, %v359
    %v375 = vshrl.u32 1326507024, %v360
    %v376 = vor.u32 %v374, %v375
    %vm377 = vcmp.lt.s32.totalorder %v358, 1
    %vm378 = vcmp.lt.s32.totalorder %v358, 2
    %vm379 = vcmp.lt.s32.totalorder %v358, 3
    %vm380 = vcmp.lt.s32.totalorder %v358, 4
    %v381 = vsel %vm377, %v361, %v364
    %v382 = vsel %vm380, %v370, 2102212464
    %v383 = vsel %vm379, %v367, %v382
    %v384 = vsel %vm378, %v381, %v383
    %v385 = vsel %vm377, %v364, %v367
    %v386 = vsel %vm380, %v373, 920167782
    %v387 = vsel %vm379, %v370, %v386
    %v388 = vsel %vm378, %v385, %v387
    %v389 = vsel %vm377, %v367, %v370
    %v390 = vsel %vm380, %v376, 1326507024
    %v391 = vsel %vm379, %v373, %v390
    %v392 = vsel %vm378, %v389, %v391
    %v393 = vshll.u32 %v353, 8
    %v394 = vmul.u32.u64.compose %v393, %v392
    %v395 = vextract.low.u32 %v394
    %v396 = vextract.high.u32 %v394
    %v397 = vmul.u32.u64.compose %v393, %v388
    %v398 = vextract.low.u32 %v397
    %v399 = vextract.high.u32 %v397
    %v400 = vmul.u32 %v393, %v384
    %v401 = vadd.s32 %v396, %v398
    %vm402 = vc.u32 %v396, %v398
    %v403 = vadd.s32 %v399, 1
    %v404 = vsel %vm402, %v403, %v399
    %v405 = vadd.s32 %v400, %v404
    %v406 = vadd.s32 %v405, 536870912
    %v407 = vshrl.u32 %v406, 30
    %v408 = vshll.u32 %v407, 30
    %v409 = vsub.s32 %v405, %v408
    %vm410 = vcmp.lt.s32.totalorder %v409, 0
    %v411 = vsub.s32 0, %v409
    %v412 = vsel %vm410, %v411, %v409
    %v413 = vclz %v412
    %v414 = vsub.s32 %v413, 2
    %vm415 = vcmp.gt.s32.totalorder 0, %v414
    %v416 = vsel %vm415, 0, %v414
    %v417 = vsub.s32 32, %v416
    %v418 = vshll.u32 %v409, %v416
    %v419 = vshrl.u32 %v401, %v417
    %v420 = vor.u32 %v418, %v419
    %v421 = vsub.s32 4294967266, %v416
    %v422 = vadd.s32 %v421, 127
    %v423 = vshll.u32 %v422, 23
    %v424 = vor.u32 4788187, %v423
    %v425 = vand.u32 2147483647, %v424
    %v427 = vcvt.s32.f32 %v420
    %v428 = vmul.f32 %v427, %v425
    %v429 = vxor.u32 %v428, 2147483648
    %v430 = vsel %vm347, %v429, %v428
    %v431 = vsub.s32 4, %v407
    %v432 = vsel %vm347, %v431, %v407
    %v433 = vsel %vm346, %v241, %v430
    %v434 = vsel %vm346, 0, %v432
    %v435 = vcosq.f32.pop %v433
    %v436 = vsinq.f32.pop %v433
    %vm437 = vweird.f32 %v241
    %v438 = vadd.s32 %v434, 3
    %v439 = vand.u32 %v438, 3
    %vm440 = vcmp.lt.s32.totalorder %v439, 2
    %vm441 = vcmp.eq.s32.totalorder %v439, 0
    %v442 = vxor.u32 %v436, 2147483648
    %v443 = vsel %vm441, %v435, %v442
    %vm444 = vcmp.eq.s32.totalorder %v439, 2
    %v445 = vxor.u32 %v435, 2147483648
    %v446 = vsel %vm444, %v445, %v436
    %v447 = vsel %vm440, %v443, %v446
    %v448 = vsel %vm437, nan, %v447
    %vm449 = vcmask 523264
    %v450 = vsel %vm449, %v132, %v344
    %v451 = vsel %vm449, %v236, %v448
    %452 = vst [vmem:[#allocation2] sm:$0xff] %v450
    %453 = vst [vmem:[#allocation4] sm:$0xff] %v451
    // Predicated region
    $region10: #{tpu_custom_call.1} parent=1 // pred_check
      _
    $region11: #{tpu_custom_call.1} parent=1 // pred_check_branch
      %455 = sbr.rel (0) target = $region13
    $region12: #{tpu_custom_call.1} parent=1 // pred_region
      %s457 = ssub.s32 128, 128
      %458 = vsyncadd [#allocation3], %s457
      %s460 = sshll.u32 [#allocation2], 4
      %s461 = int_to_ptr.vmem [resolvable:$true] %s460
      %463 = dma.vmem_to_hbm [thread:$0]  %s461, 128, %s2, [#allocation3]
    $region13: #{tpu_custom_call.1} parent=1 // pred_fallthru
      _
    // Predicated region
    $region14: #{tpu_custom_call.1} parent=1 // pred_check
      _
    $region15: #{tpu_custom_call.1} parent=1 // pred_check_branch
      %465 = sbr.rel (0) target = $region17
    $region16: #{tpu_custom_call.1} parent=1 // pred_region
      %s467 = ssub.s32 128, 128
      %468 = vsyncadd [#allocation5], %s467
      %s470 = sshll.u32 [#allocation4], 4
      %s471 = int_to_ptr.vmem [resolvable:$true] %s470
      %473 = dma.vmem_to_hbm [thread:$0]  %s471, 128, %s3, [#allocation5]
    $region17: #{tpu_custom_call.1} parent=1 // pred_fallthru
      _
    // Predicated region
    $region18: #{tpu_custom_call.1} parent=1 // pred_check
      _
    $region19: #{tpu_custom_call.1} parent=1 // pred_check_branch
      %475 = sbr.rel (0) target = $region21
    $region20: #{tpu_custom_call.1} parent=1 // pred_region
      %476 = dma.done [#allocation3], 128
    $region21: #{tpu_custom_call.1} parent=1 // pred_fallthru
      _
    // Predicated region
    $region22: #{tpu_custom_call.1} parent=1 // pred_check
      _
    $region23: #{tpu_custom_call.1} parent=1 // pred_check_branch
      %478 = sbr.rel (0) target = $region25
    $region24: #{tpu_custom_call.1} parent=1 // pred_region
      %479 = dma.done [#allocation5], 128
    $region25: #{tpu_custom_call.1} parent=1 // pred_fallthru
      _
    %480 = vsyncpa [#allocation3], 1
    %481 = vsyncpa [#allocation5], 1

</llo_original>
